<compile_context>
chip_gen: v7x
topology: tpu7x:2x2x1
jax: 0.10.0
libtpu: 0.0.40
codegen_flags: <defaults>
</compile_context>

<pallas_src>
import functools

import jax
import jax.numpy as jnp
from jax.experimental import pallas as pl
from jax.experimental.pallas import tpu as pltpu


# ----------------------------------------------------------------------------
# One-time parameter preparation (call at model-init time, NOT per forward).
# ----------------------------------------------------------------------------
def prepare_sparse_activation_params(w1, b1, w2, b2, *, param_dtype=jnp.bfloat16):
    """w1: [E, D_in, H]; b1: [E, 1, H]; w2: [E, H, D_out]; b2: [E, 1, D_out].

    Returns (w1f, b1f, w2p, b2p, d_out) with:
      w1f : [D_in, E*H]   (bf16)   ensemble axis fused into the contraction dim
      b1f : [1, E*H]      (f32)
      w2p : [E*H, Dp]     (bf16)   1/E folded in, zero-padded to Dp = 128-multiple
      b2p : [1, Dp]       (f32)    summed over E, 1/E folded in, zero-padded
    """
    E, D_in, H = w1.shape
    _, _, D_out = w2.shape
    EH = E * H
    inv_e = 1.0 / float(E)

    # Fuse ensemble axis into the contraction dims (E-outer, H-inner ordering,
    # consistent between w1f / b1f and w2f rows).
    w1f = jnp.transpose(w1, (1, 0, 2)).reshape(D_in, EH)
    b1f = b1.reshape(1, EH).astype(jnp.float32)

    # Layer 2: the sum over E falls out of the contraction; fold the 1/E mean
    # into the weights/bias once here (one-time, so not the "pre-scale in the
    # wrapper" anti-pattern).
    w2f = w2.reshape(EH, D_out) * inv_e
    b2s = jnp.sum(b2[:, 0, :], axis=0, keepdims=True) * inv_e

    # Lane-dense output: pad D_out up to a multiple of 128 lanes with zero
    # columns so the kernel store is a full, unmasked vst.
    Dp = ((D_out + 127) // 128) * 128
    pad = Dp - D_out
    w2p = jax.lax.pad(w2f, jnp.zeros((), w2f.dtype), ((0, 0, 0), (0, pad, 0)))
    b2p = jax.lax.pad(b2s, jnp.zeros((), b2s.dtype), ((0, 0, 0), (0, pad, 0)))

    return (
        w1f.astype(param_dtype),
        b1f,
        w2p.astype(param_dtype),
        b2p.astype(jnp.float32),
        int(D_out),
    )


# ----------------------------------------------------------------------------
# Kernel: fused ensemble 2-layer MLP on one batch tile.
# ----------------------------------------------------------------------------
def _fused_ensemble_kernel(x_ref, w1_ref, b1_ref, w2_ref, b2_ref, o_ref):
    # Layer 1 for all ensemble members at once: [TB, D_in] @ [D_in, E*H].
    # bf16 MXU operands, f32 accumulation; bias-add / ReLU kept in f32
    # (v5e VPU has no bf16 datapath, and it is exact either way).
    xb = x_ref[...].astype(w1_ref.dtype)
    h = jnp.dot(xb, w1_ref[...], preferred_element_type=jnp.float32) + b1_ref[...]
    h = jnp.maximum(h, 0.0)
    # Layer 2 + ensemble mean in one contraction (1/E already folded into
    # w2/b2 at prep time): [TB, E*H] @ [E*H, Dp].
    y = jnp.dot(h.astype(w2_ref.dtype), w2_ref[...],
                preferred_element_type=jnp.float32) + b2_ref[...]
    o_ref[...] = y.astype(o_ref.dtype)


# ----------------------------------------------------------------------------
# Forward: the hot path is one pallas_call (+ optional narrow slice).
# ----------------------------------------------------------------------------
def sparse_activation_forward(x, prepared, *, block_b=1024, return_padded=False):
    """x: [B, D_in] (f32 or bf16); prepared = prepare_sparse_activation_params(...).

    Equals mean_e(relu(x @ W1_e + b1_e) @ W2_e + b2_e) followed by nn.Identity().
    """
    w1f, b1f, w2p, b2p, d_out = prepared
    B, D_in = x.shape
    EH = w1f.shape[1]
    Dp = w2p.shape[1]

    # Batch tile: multiple of 8 sublanes (or the full batch when B is small).
    # v7x: size assuming 64 MiB VMEM -> 1024-2048 is safe double-buffered.
    # v6e: can be pushed to 2048-4096 (raise vmem_limit_bytes if the 32 MiB
    # scoped default trips).  Default 1024 is safe everywhere.
    tb = min(block_b, B)
    if tb != B:
        tb = max(8, (tb // 8) * 8)
    grid = (pl.cdiv(B, tb),)

    out_padded = pl.pallas_call(
        _fused_ensemble_kernel,
        out_shape=jax.ShapeDtypeStruct((B, Dp), jnp.float32),
        grid=grid,
        in_specs=[
            pl.BlockSpec((tb, D_in), lambda i: (i, 0)),   # x tile (pipelined)
            pl.BlockSpec((D_in, EH), lambda i: (0, 0)),   # W1 fused  (resident)
            pl.BlockSpec((1, EH), lambda i: (0, 0)),      # b1 fused  (resident)
            pl.BlockSpec((EH, Dp), lambda i: (0, 0)),     # W2 fused+scaled+padded
            pl.BlockSpec((1, Dp), lambda i: (0, 0)),      # b2 summed+scaled+padded
        ],
        out_specs=pl.BlockSpec((tb, Dp), lambda i: (i, 0)),
        compiler_params=pltpu.CompilerParams(
            dimension_semantics=("parallel",),            # v7x megacore shards B
        ),
    )(x, w1f, b1f, w2p, b2p)

    # nn.Identity() sparse layer is a no-op.  For large B, prefer
    # return_padded=True and fuse the narrow slice into the consumer to avoid
    # an extra full HBM pass over the (mostly padding) output.
    if return_padded:
        return out_padded
    return out_padded[:, :d_out]


# ----------------------------------------------------------------------------
# References.
# ----------------------------------------------------------------------------
def sparse_activation_forward_ref(x, w1, b1, w2, b2):
    """Pure-JAX f32 reference: mean over ensemble of 2-layer MLPs, then Identity."""
    def one(wa, ba, wb, bb):
        h = jnp.maximum(x @ wa + ba, 0.0)
        return h @ wb + bb
    outs = jax.vmap(one)(w1, b1[:, 0, :], w2, b2[:, 0, :])   # [E, B, D_out]
    return jnp.mean(outs, axis=0)


def sparse_activation_forward_prepared_ref(x, prepared):
    """Pure-JAX reference using the SAME prepared (bf16) params as the kernel —
    isolates kernel-structure correctness from bf16 quantization."""
    w1f, b1f, w2p, b2p, d_out = prepared
    h = jnp.maximum(
        jnp.dot(x.astype(w1f.dtype), w1f, preferred_element_type=jnp.float32) + b1f,
        0.0)
    y = jnp.dot(h.astype(w2p.dtype), w2p, preferred_element_type=jnp.float32) + b2p
    return y[:, :d_out]


if __name__ == "__main__":
    # Small shapes consistent with the wrapped sub-model's forward.
    B, D_IN, HIDDEN, D_OUT, NUM_MODELS = 8, 32, 64, 16, 4

    key = jax.random.PRNGKey(0)
    kx, kw1, kb1, kw2, kb2 = jax.random.split(key, 5)

    x = jax.random.normal(kx, (B, D_IN), dtype=jnp.float32)

    # Deterministic per-member parameters (synthetic init, not a checkpoint).
    w1 = jax.random.normal(kw1, (NUM_MODELS, D_IN, HIDDEN), dtype=jnp.float32) * 0.1
    b1 = jax.random.normal(kb1, (NUM_MODELS, 1, HIDDEN), dtype=jnp.float32) * 0.1
    w2 = jax.random.normal(kw2, (NUM_MODELS, HIDDEN, D_OUT), dtype=jnp.float32) * 0.1
    b2 = jax.random.normal(kb2, (NUM_MODELS, 1, D_OUT), dtype=jnp.float32) * 0.1

    # One-time weight prep (model-init time), OUT of the per-call hot path.
    prepared = jax.block_until_ready(
        prepare_sparse_activation_params(w1, b1, w2, b2))

    out = jax.block_until_ready(sparse_activation_forward(x, prepared))
    assert out.shape == (B, D_OUT)

    # 1) Structural correctness: kernel vs. pure-JAX path using identical
    #    prepared bf16 params + f32 accumulation -> should match tightly.
    ref_same_params = sparse_activation_forward_prepared_ref(x, prepared)
    assert jnp.allclose(out, ref_same_params, atol=1e-4, rtol=1e-4), \
        "mismatch vs prepared-params reference"

    # 2) End-to-end vs. the f32 ensemble reference: difference is bounded by
    #    bf16 operand rounding (~0.4% relative), well inside 2e-2.
    ref_f32 = sparse_activation_forward_ref(x, w1, b1, w2, b2)
    assert jnp.allclose(out, ref_f32, atol=2e-2, rtol=2e-2), \
        "mismatch vs f32 ensemble reference"

    print("KERNEL_OK")
</pallas_src>

<mosaic_0001>
module attributes {stable_mosaic.version = 11 : i64} {
  func.func @_fused_ensemble_kernel(%arg0: i32, %arg1: memref<8x32xf32, #tpu.memory_space<vmem>>, %arg2: memref<32x256xbf16, #tpu.memory_space<vmem>>, %arg3: memref<1x256xf32, #tpu.memory_space<vmem>>, %arg4: memref<256x128xbf16, #tpu.memory_space<vmem>>, %arg5: memref<1x128xf32, #tpu.memory_space<vmem>>, %arg6: memref<8x128xf32, #tpu.memory_space<vmem>>) attributes {dimension_semantics = [#tpu.dimension_semantics<parallel>], iteration_bounds = array<i64: 1>, scalar_prefetch = 0 : i64, scratch_operands = 0 : i64, tpu.core_type = #tpu.core_type<tc>, window_params = [{transform_indices = @transform_0, window_bounds = array<i64: 8, 32>}, {pipeline_mode = #tpu.pipeline_mode<synchronous>, transform_indices = @transform_1, window_bounds = array<i64: 32, 256>}, {pipeline_mode = #tpu.pipeline_mode<synchronous>, transform_indices = @transform_2, window_bounds = array<i64: 1, 256>}, {pipeline_mode = #tpu.pipeline_mode<synchronous>, transform_indices = @transform_3, window_bounds = array<i64: 256, 128>}, {pipeline_mode = #tpu.pipeline_mode<synchronous>, transform_indices = @transform_4, window_bounds = array<i64: 1, 128>}, {transform_indices = @transform_5, window_bounds = array<i64: 8, 128>}]} {
    %c0 = arith.constant 0 : index
    %c0_0 = arith.constant 0 : index
    %0 = vector.load %arg1[%c0, %c0_0] : memref<8x32xf32, #tpu.memory_space<vmem>>, vector<8x32xf32>
    %1 = arith.truncf %0 : vector<8x32xf32> to vector<8x32xbf16>
    %c0_1 = arith.constant 0 : index
    %c0_2 = arith.constant 0 : index
    %2 = vector.load %arg2[%c0_1, %c0_2] : memref<32x256xbf16, #tpu.memory_space<vmem>>, vector<32x256xbf16>
    %cst = arith.constant dense<0.000000e+00> : vector<8x256xf32>
    %3 = tpu.matmul %1, %2, %cst {dimension_numbers = #tpu.dot_dimension_numbers<[1], [0], [0], [1], [0, 0, 1, 1], [], []>} : vector<8x32xbf16>, vector<32x256xbf16>, vector<8x256xf32> -> vector<8x256xf32>
    %c0_3 = arith.constant 0 : index
    %c0_4 = arith.constant 0 : index
    %4 = vector.load %arg3[%c0_3, %c0_4] : memref<1x256xf32, #tpu.memory_space<vmem>>, vector<1x256xf32>
    %5 = vector.broadcast %4 : vector<1x256xf32> to vector<8x256xf32>
    %6 = arith.addf %3, %5 : vector<8x256xf32>
    %cst_5 = arith.constant 0.000000e+00 : f32
    %7 = vector.broadcast %cst_5 : f32 to vector<8x256xf32>
    %8 = arith.maximumf %6, %7 : vector<8x256xf32>
    %9 = arith.truncf %8 : vector<8x256xf32> to vector<8x256xbf16>
    %c0_6 = arith.constant 0 : index
    %c0_7 = arith.constant 0 : index
    %10 = vector.load %arg4[%c0_6, %c0_7] : memref<256x128xbf16, #tpu.memory_space<vmem>>, vector<256x128xbf16>
    %cst_8 = arith.constant dense<0.000000e+00> : vector<8x128xf32>
    %11 = tpu.matmul %9, %10, %cst_8 {dimension_numbers = #tpu.dot_dimension_numbers<[1], [0], [0], [1], [0, 0, 1, 1], [], []>} : vector<8x256xbf16>, vector<256x128xbf16>, vector<8x128xf32> -> vector<8x128xf32>
    %c0_9 = arith.constant 0 : index
    %c0_10 = arith.constant 0 : index
    %12 = vector.load %arg5[%c0_9, %c0_10] : memref<1x128xf32, #tpu.memory_space<vmem>>, vector<1x128xf32>
    %13 = vector.broadcast %12 : vector<1x128xf32> to vector<8x128xf32>
    %14 = arith.addf %11, %13 : vector<8x128xf32>
    %c0_11 = arith.constant 0 : index
    %c0_12 = arith.constant 0 : index
    %15 = vector.load %arg6[%c0_11, %c0_12] : memref<8x128xf32, #tpu.memory_space<vmem>>, vector<8x128xf32>
    tpu.vector_store %arg6[%c0_11, %c0_12], %14 {strides = array<i32>} : memref<8x128xf32, #tpu.memory_space<vmem>>, vector<8x128xf32>,
    return
  }
  func.func @transform_0(%arg0: i32) -> (i32, i32) {
    %c0_i32 = arith.constant 0 : i32
    %c0_i32_0 = arith.constant 0 : i32
    return %arg0, %c0_i32 : i32, i32
  }
  func.func @transform_1(%arg0: i32) -> (i32, i32) {
    %c0_i32 = arith.constant 0 : i32
    %c0_i32_0 = arith.constant 0 : i32
    %c0_i32_1 = arith.constant 0 : i32
    return %c0_i32, %c0_i32_0 : i32, i32
  }
  func.func @transform_2(%arg0: i32) -> (i32, i32) {
    %c0_i32 = arith.constant 0 : i32
    %c0_i32_0 = arith.constant 0 : i32
    %c0_i32_1 = arith.constant 0 : i32
    return %c0_i32, %c0_i32_0 : i32, i32
  }
  func.func @transform_3(%arg0: i32) -> (i32, i32) {
    %c0_i32 = arith.constant 0 : i32
    %c0_i32_0 = arith.constant 0 : i32
    %c0_i32_1 = arith.constant 0 : i32
    return %c0_i32, %c0_i32_0 : i32, i32
  }
  func.func @transform_4(%arg0: i32) -> (i32, i32) {
    %c0_i32 = arith.constant 0 : i32
    %c0_i32_0 = arith.constant 0 : i32
    %c0_i32_1 = arith.constant 0 : i32
    return %c0_i32, %c0_i32_0 : i32, i32
  }
  func.func @transform_5(%arg0: i32) -> (i32, i32) {
    %c0_i32 = arith.constant 0 : i32
    %c0_i32_0 = arith.constant 0 : i32
    return %arg0, %c0_i32 : i32, i32
  }
}

</mosaic_0001>

<llo_original>
// kernel: tpu_custom_call.1
$region0: #{tpu_custom_call.1}
  #allocation0 [shape = 'u32[]', space=smem, size = 0x4, offset = 0x4, fixed_abs, tag = 'smem constant byte address 0x4 - core index']
  #allocation1 [shape = 'u32[144,128]{1,0:T(1,128)}', space=vmem, size = 0x12000, scoped, tag = 'internal scratch']
  %s0 = inlined_call_operand.hbm [shape: f32[8,32], index: 0, kind: input, shape index: {}]
  %s1 = inlined_call_operand.hbm [shape: bf16[32,256], index: 1, kind: input, shape index: {}]
  %s2 = inlined_call_operand.vmem [shape: f32[1,256], index: 2, kind: input, shape index: {}]
  %s3 = inlined_call_operand.hbm [shape: bf16[256,128], index: 3, kind: input, shape index: {}]
  %s4 = inlined_call_operand.vmem [shape: f32[1,128], index: 4, kind: input, shape index: {}]
  %s5 = inlined_call_operand.hbm [shape: f32[8,128], index: 5, kind: output, shape index: {}]
  %s6 = sld [smem:[#allocation0]]
  $region42: #{tpu_custom_call.1} parent=0
    _
  %s8 = ssub.s32 1, %s6
  %s9 = scalar_select 0, %s8, %s6
  $region1: #{tpu_custom_call.1} parent=0
    #allocation2 [shape = 'u8[4096]{0}', space=vmem, size = 0x1000, scoped, tag = 'input window, operand 0, single buffered']
    #allocation3 [shape = 's32[1]{0}', space=sflag, size = 0x4, scoped, tag = 'scoped memory for tpu_custom_call.1']
    #allocation4 [shape = 's32[1]{0}', space=sflag, size = 0x4, scoped, tag = 'scoped memory for tpu_custom_call.1']
    #allocation5 [shape = 'u8[16384]{0}', space=vmem, size = 0x4000, scoped, tag = 'input window, operand 1, single buffered']
    #allocation6 [shape = 's32[1]{0}', space=sflag, size = 0x4, scoped, tag = 'scoped memory for tpu_custom_call.1']
    #allocation7 [shape = 'u8[65536]{0}', space=vmem, size = 0x10000, scoped, tag = 'input window, operand 3, single buffered']
    #allocation8 [shape = 'u8[4096]{0}', space=vmem, size = 0x1000, scoped, tag = 'output window, operand 0, single buffered']
    %10 = vsyncpa [#allocation3], 0
    %11 = vsyncpa [#allocation6], 0
    %12 = vsyncpa [#allocation4], 0
    // Predicated region
    $region2: #{tpu_custom_call.1} parent=1 // pred_check
      _
    $region3: #{tpu_custom_call.1} parent=1 // pred_check_branch
      %14 = sbr.rel (0) target = $region5
    $region4: #{tpu_custom_call.1} parent=1 // pred_region
      %s16 = ssub.s32 128, 128
      %17 = vsyncadd [#allocation3], %s16
      %s19 = sshll.u32 [#allocation2], 4
      %s20 = int_to_ptr.vmem [resolvable:$true] %s19
      %22 = dma.hbm_to_vmem [thread:$0]  %s0, 128, %s20, [#allocation3]
    $region5: #{tpu_custom_call.1} parent=1 // pred_fallthru
      _
    // Predicated region
    $region6: #{tpu_custom_call.1} parent=1 // pred_check
      _
    $region7: #{tpu_custom_call.1} parent=1 // pred_check_branch
      %24 = sbr.rel (0) target = $region9
    $region8: #{tpu_custom_call.1} parent=1 // pred_region
      %s26 = ssub.s32 512, 512
      %27 = vsyncadd [#allocation6], %s26
      %s28 = sshll.u32 [#allocation5], 4
      %s29 = int_to_ptr.vmem [resolvable:$true] %s28
      %34 = dma.hbm_to_vmem [thread:$0]  %s1, 512, %s29, [#allocation6], 128, 128, 8
    $region9: #{tpu_custom_call.1} parent=1 // pred_fallthru
      _
    // Predicated region
    $region10: #{tpu_custom_call.1} parent=1 // pred_check
      _
    $region11: #{tpu_custom_call.1} parent=1 // pred_check_branch
      %36 = sbr.rel (0) target = $region13
    $region12: #{tpu_custom_call.1} parent=1 // pred_region
      _
    $region13: #{tpu_custom_call.1} parent=1 // pred_fallthru
      _
    // Predicated region
    $region14: #{tpu_custom_call.1} parent=1 // pred_check
      _
    $region15: #{tpu_custom_call.1} parent=1 // pred_check_branch
      %38 = sbr.rel (0) target = $region17
    $region16: #{tpu_custom_call.1} parent=1 // pred_region
      %s40 = ssub.s32 2048, 2048
      %41 = vsyncadd [#allocation6], %s40
      %s42 = sshll.u32 [#allocation7], 4
      %s43 = int_to_ptr.vmem [resolvable:$true] %s42
      %48 = dma.hbm_to_vmem [thread:$0]  %s3, 2048, %s43, [#allocation6], 64, 64, 4
    $region17: #{tpu_custom_call.1} parent=1 // pred_fallthru
      _
    // Predicated region
    $region18: #{tpu_custom_call.1} parent=1 // pred_check
      _
    $region19: #{tpu_custom_call.1} parent=1 // pred_check_branch
      %50 = sbr.rel (0) target = $region21
    $region20: #{tpu_custom_call.1} parent=1 // pred_region
      _
    $region21: #{tpu_custom_call.1} parent=1 // pred_fallthru
      _
    // Predicated region
    $region22: #{tpu_custom_call.1} parent=1 // pred_check
      _
    $region23: #{tpu_custom_call.1} parent=1 // pred_check_branch
      %52 = sbr.rel (0) target = $region25
    $region24: #{tpu_custom_call.1} parent=1 // pred_region
      %53 = dma.done [#allocation3], 128
    $region25: #{tpu_custom_call.1} parent=1 // pred_fallthru
      _
    // Predicated region
    $region26: #{tpu_custom_call.1} parent=1 // pred_check
      _
    $region27: #{tpu_custom_call.1} parent=1 // pred_check_branch
      %55 = sbr.rel (0) target = $region29
    $region28: #{tpu_custom_call.1} parent=1 // pred_region
      %56 = dma.done [#allocation6], 512
    $region29: #{tpu_custom_call.1} parent=1 // pred_fallthru
      _
    // Predicated region
    $region30: #{tpu_custom_call.1} parent=1 // pred_check
      _
    $region31: #{tpu_custom_call.1} parent=1 // pred_check_branch
      %58 = sbr.rel (0) target = $region33
    $region32: #{tpu_custom_call.1} parent=1 // pred_region
      %59 = dma.done [#allocation6], 2048
    $region33: #{tpu_custom_call.1} parent=1 // pred_fallthru
      _
    %v61 = vld [vmem:[#allocation2] sm:$0xff]
    %v62 = vpack.c.bf16 %v61, %v61
    %v63 = vld [vmem:[#allocation5] sm:$0xff]
    %v64 = vld [vmem:[#allocation5 + $0x8] sm:$0xff]
    %v65 = vld [vmem:[#allocation5 + $0x10] sm:$0xff]
    %v66 = vld [vmem:[#allocation5 + $0x18] sm:$0xff]
    %v67 = vld [vmem:[%s2] sm:$0x3]
    %v69 = vlaneseq
    %v70 = vshrl.u32 %v69, 7
    %v71 = vsub.s32 0, %v70
    %v72 = vrot.slane %v67, %v71
    %v73 = vlaneseq
    %v74 = vshrl.u32 %v73, 7
    %v75 = vsub.s32 1, %v74
    %v76 = vrot.slane %v67, %v75
    %v83 = vunpack.c.l.b16 %v63
    %v84 = vunpack.c.h.b16 %v63
    %v85 = vunpack.c.l.b16 %v64
    %v86 = vunpack.c.h.b16 %v64
    %v87 = vunpack.c.l.b16 %v65
    %v88 = vunpack.c.h.b16 %v65
    %v89 = vunpack.c.l.b16 %v66
    %v90 = vunpack.c.h.b16 %v66
    %v91 = vpack.c.b16 %v85, %v83
    %v92 = vpack.c.b16 %v86, %v84
    %v93 = vpack.c.b16 %v89, %v87
    %v94 = vpack.c.b16 %v90, %v88
    %vm99 = vcmask 261120
    %v101 = vsel %vm99, %v62, 0
    %103 = vmatprep.subr.bf16.mxu0 %v92
    %104 = vmatpush1.bf16.msra.mxu0 %v91
    %105 = vmatprep.subr.bf16.mxu0 %v94
    %106 = vmatpush1.bf16.msra.mxu0 %v93
    %107 = vmatprep.subr.bf16.mxu0 0
    %108 = vmatpush1.bf16.msra.mxu0 0
    %109 = vmatprep.subr.bf16.mxu0 0
    %110 = vmatpush1.bf16.msra.mxu0 0
    %111 = vmatprep.subr.bf16.mxu0 0
    %112 = vmatpush1.bf16.msra.mxu0 0
    %113 = vmatprep.subr.bf16.mxu0 0
    %114 = vmatpush1.bf16.msra.mxu0 0
    %115 = vmatprep.subr.bf16.mxu0 0
    %116 = vmatpush1.bf16.msra.mxu0 0
    %117 = vmatprep.subr.bf16.mxu0 0
    %118 = vmatpush1.bf16.msra.mxu0 0
    %119 = vmatprep.subr.bf16.mxu0 0
    %120 = vmatpush1.bf16.msra.mxu0 0
    %121 = vmatprep.subr.bf16.mxu0 0
    %122 = vmatpush1.bf16.msra.mxu0 0
    %123 = vmatprep.subr.bf16.mxu0 0
    %124 = vmatpush1.bf16.msra.mxu0 0
    %125 = vmatprep.subr.bf16.mxu0 0
    %126 = vmatpush1.bf16.msra.mxu0 0
    %127 = vmatprep.subr.bf16.mxu0 0
    %128 = vmatpush1.bf16.msra.mxu0 0
    %129 = vmatprep.subr.bf16.mxu0 0
    %130 = vmatpush1.bf16.msra.mxu0 0
    %131 = vmatprep.subr.bf16.mxu0 0
    %132 = vmatpush1.bf16.msra.mxu0 0
    %133 = vmatprep.subr.bf16.mxu0 0
    %134 = vmatpush1.bf16.msra.mxu0 0
    %135 = vmatprep.mubr.bf16.mxu0 0
    %136 = vmatmul.mubr.bf16.gmra.mrb[0].mxu0 %v101
    %v137 = vpop.f32.mrb[0].mxu0
    %v138 = vadd.f32 %v72, %v137
    %v139 = vpop.f32.mrb[0].mxu0
    %v140 = vadd.f32 %v76, %v139
    %v141 = vpop.f32.mrb[0].mxu0
    %v142 = vpop.f32.mrb[0].mxu0
    %143 = vdwg.mxu0
    %v144 = vmax.f32 %v138, 0.0
    %v145 = vmax.f32 %v140, 0.0
    %v146 = vpack.c.bf16 %v144, %v144
    %v147 = vpack.c.bf16 %v145, %v145
    %v148 = vld [vmem:[#allocation7] sm:$0xf]
    %v149 = vld [vmem:[#allocation7 + $0x4] sm:$0xf]
    %v150 = vld [vmem:[#allocation7 + $0x8] sm:$0xf]
    %v151 = vld [vmem:[#allocation7 + $0xc] sm:$0xf]
    %v152 = vld [vmem:[#allocation7 + $0x10] sm:$0xf]
    %v153 = vld [vmem:[#allocation7 + $0x14] sm:$0xf]
    %v154 = vld [vmem:[#allocation7 + $0x18] sm:$0xf]
    %v155 = vld [vmem:[#allocation7 + $0x1c] sm:$0xf]
    %v156 = vld [vmem:[#allocation7 + $0x20] sm:$0xf]
    %v157 = vld [vmem:[#allocation7 + $0x24] sm:$0xf]
    %v158 = vld [vmem:[#allocation7 + $0x28] sm:$0xf]
    %v159 = vld [vmem:[#allocation7 + $0x2c] sm:$0xf]
    %v160 = vld [vmem:[#allocation7 + $0x30] sm:$0xf]
    %v161 = vld [vmem:[#allocation7 + $0x34] sm:$0xf]
    %v162 = vld [vmem:[#allocation7 + $0x38] sm:$0xf]
    %v163 = vld [vmem:[#allocation7 + $0x3c] sm:$0xf]
    %v164 = vld [vmem:[#allocation7 + $0x40] sm:$0xf]
    %v165 = vld [vmem:[#allocation7 + $0x44] sm:$0xf]
    %v166 = vld [vmem:[#allocation7 + $0x48] sm:$0xf]
    %v167 = vld [vmem:[#allocation7 + $0x4c] sm:$0xf]
    %v168 = vld [vmem:[#allocation7 + $0x50] sm:$0xf]
    %v169 = vld [vmem:[#allocation7 + $0x54] sm:$0xf]
    %v170 = vld [vmem:[#allocation7 + $0x58] sm:$0xf]
    %v171 = vld [vmem:[#allocation7 + $0x5c] sm:$0xf]
    %v172 = vld [vmem:[#allocation7 + $0x60] sm:$0xf]
    %v173 = vld [vmem:[#allocation7 + $0x64] sm:$0xf]
    %v174 = vld [vmem:[#allocation7 + $0x68] sm:$0xf]
    %v175 = vld [vmem:[#allocation7 + $0x6c] sm:$0xf]
    %v176 = vld [vmem:[#allocation7 + $0x70] sm:$0xf]
    %v177 = vld [vmem:[#allocation7 + $0x74] sm:$0xf]
    %v178 = vld [vmem:[#allocation7 + $0x78] sm:$0xf]
    %v179 = vld [vmem:[#allocation7 + $0x7c] sm:$0xf]
    %v180 = vld [vmem:[%s4] sm:$0x1]
    %v182 = vlaneseq
    %v183 = vshrl.u32 %v182, 7
    %v184 = vsub.s32 0, %v183
    %v185 = vrot.slane %v180, %v184
    %v219 = vunpack.c.l.b16 %v148
    %v220 = vunpack.c.l.b16 %v149
    %v221 = vunpack.c.l.b16 %v150
    %v222 = vunpack.c.l.b16 %v151
    %v223 = vunpack.c.l.b16 %v152
    %v224 = vunpack.c.l.b16 %v153
    %v225 = vunpack.c.l.b16 %v154
    %v226 = vunpack.c.l.b16 %v155
    %v227 = vunpack.c.l.b16 %v156
    %v228 = vunpack.c.l.b16 %v157
    %v229 = vunpack.c.l.b16 %v158
    %v230 = vunpack.c.l.b16 %v159
    %v231 = vunpack.c.l.b16 %v160
    %v232 = vunpack.c.l.b16 %v161
    %v233 = vunpack.c.l.b16 %v162
    %v234 = vunpack.c.l.b16 %v163
    %v235 = vunpack.c.l.b16 %v164
    %v236 = vunpack.c.l.b16 %v165
    %v237 = vunpack.c.l.b16 %v166
    %v238 = vunpack.c.l.b16 %v167
    %v239 = vunpack.c.l.b16 %v168
    %v240 = vunpack.c.l.b16 %v169
    %v241 = vunpack.c.l.b16 %v170
    %v242 = vunpack.c.l.b16 %v171
    %v243 = vunpack.c.l.b16 %v172
    %v244 = vunpack.c.l.b16 %v173
    %v245 = vunpack.c.l.b16 %v174
    %v246 = vunpack.c.l.b16 %v175
    %v247 = vunpack.c.l.b16 %v176
    %v248 = vunpack.c.l.b16 %v177
    %v249 = vunpack.c.l.b16 %v178
    %v250 = vunpack.c.l.b16 %v179
    %v251 = vpack.c.b16 %v220, %v219
    %v252 = vpack.c.b16 %v222, %v221
    %v253 = vpack.c.b16 %v224, %v223
    %v254 = vpack.c.b16 %v226, %v225
    %v255 = vpack.c.b16 %v228, %v227
    %v256 = vpack.c.b16 %v230, %v229
    %v257 = vpack.c.b16 %v232, %v231
    %v258 = vpack.c.b16 %v234, %v233
    %v259 = vpack.c.b16 %v236, %v235
    %v260 = vpack.c.b16 %v238, %v237
    %v261 = vpack.c.b16 %v240, %v239
    %v262 = vpack.c.b16 %v242, %v241
    %v263 = vpack.c.b16 %v244, %v243
    %v264 = vpack.c.b16 %v246, %v245
    %v265 = vpack.c.b16 %v248, %v247
    %v266 = vpack.c.b16 %v250, %v249
    %283 = vmatprep.subr.bf16.mxu0 0
    %284 = vmatpush1.bf16.msra.mxu0 %v251
    %285 = vmatprep.subr.bf16.mxu0 0
    %286 = vmatpush1.bf16.msra.mxu0 %v252
    %287 = vmatprep.subr.bf16.mxu0 0
    %288 = vmatpush1.bf16.msra.mxu0 %v253
    %289 = vmatprep.subr.bf16.mxu0 0
    %290 = vmatpush1.bf16.msra.mxu0 %v254
    %291 = vmatprep.subr.bf16.mxu0 0
    %292 = vmatpush1.bf16.msra.mxu0 %v255
    %293 = vmatprep.subr.bf16.mxu0 0
    %294 = vmatpush1.bf16.msra.mxu0 %v256
    %295 = vmatprep.subr.bf16.mxu0 0
    %296 = vmatpush1.bf16.msra.mxu0 %v257
    %297 = vmatprep.subr.bf16.mxu0 0
    %298 = vmatpush1.bf16.msra.mxu0 %v258
    %299 = vmatprep.subr.bf16.mxu0 0
    %300 = vmatpush1.bf16.msra.mxu0 %v259
    %301 = vmatprep.subr.bf16.mxu0 0
    %302 = vmatpush1.bf16.msra.mxu0 %v260
    %303 = vmatprep.subr.bf16.mxu0 0
    %304 = vmatpush1.bf16.msra.mxu0 %v261
    %305 = vmatprep.subr.bf16.mxu0 0
    %306 = vmatpush1.bf16.msra.mxu0 %v262
    %307 = vmatprep.subr.bf16.mxu0 0
    %308 = vmatpush1.bf16.msra.mxu0 %v263
    %309 = vmatprep.subr.bf16.mxu0 0
    %310 = vmatpush1.bf16.msra.mxu0 %v264
    %311 = vmatprep.subr.bf16.mxu0 0
    %312 = vmatpush1.bf16.msra.mxu0 %v265
    %313 = vmatprep.subr.bf16.mxu0 0
    %314 = vmatpush1.bf16.msra.mxu0 %v266
    %315 = vmatprep.mubr.bf16.mxu0 %v147
    %316 = vmatmul.mubr.bf16.gmra.mrb[0].mxu0 %v146
    %v317 = vpop.f32.mrb[0].mxu0
    %v318 = vadd.f32 %v185, %v317
    %v319 = vpop.f32.mrb[0].mxu0
    %v320 = vpop.f32.mrb[0].mxu0
    %v321 = vpop.f32.mrb[0].mxu0
    %322 = vdwg.mxu0
    %323 = vst [vmem:[#allocation8] sm:$0xff] %v318
    // Predicated region
    $region34: #{tpu_custom_call.1} parent=1 // pred_check
      _
    $region35: #{tpu_custom_call.1} parent=1 // pred_check_branch
      %325 = sbr.rel (0) target = $region37
    $region36: #{tpu_custom_call.1} parent=1 // pred_region
      %s327 = ssub.s32 128, 128
      %328 = vsyncadd [#allocation4], %s327
      %s330 = sshll.u32 [#allocation8], 4
      %s331 = int_to_ptr.vmem [resolvable:$true] %s330
      %333 = dma.vmem_to_hbm [thread:$0]  %s331, 128, %s5, [#allocation4]
    $region37: #{tpu_custom_call.1} parent=1 // pred_fallthru
      _
    // Predicated region
    $region38: #{tpu_custom_call.1} parent=1 // pred_check
      _
    $region39: #{tpu_custom_call.1} parent=1 // pred_check_branch
      %335 = sbr.rel (0) target = $region41
    $region40: #{tpu_custom_call.1} parent=1 // pred_region
      %336 = dma.done [#allocation4], 128
    $region41: #{tpu_custom_call.1} parent=1 // pred_fallthru
      _
    %337 = vsyncpa [#allocation3], 1
    %338 = vsyncpa [#allocation6], 1
    %339 = vsyncpa [#allocation4], 1

</llo_original>
